<compile_context>
chip_gen: v7x
topology: tpu7x:2x2x1
jax: 0.10.0
libtpu: 0.0.40
codegen_flags: <defaults>
</compile_context>

<pallas_src>
import functools

import jax
import jax.numpy as jnp
import numpy as np
from jax import lax
from jax.experimental import pallas as pl
from jax.experimental.pallas import tpu as pltpu


# ----------------------------------------------------------------------------
# Kernel A: fused QKV projection  ->  pre-scaled q (tm, C)  and  kv (tm, 2C)
# ----------------------------------------------------------------------------
def qkv_proj_kernel(x_ref, w_ref, q_ref, kv_ref, *, n_embd, scale):
    # x_ref: (1, tm, C) bf16   w_ref: (C, 3C) bf16
    # q_ref: (1, tm, C) bf16 (scale folded in)   kv_ref: (1, tm, 2C) bf16
    y = jnp.dot(x_ref[0], w_ref[...], preferred_element_type=jnp.float32)  # (tm, 3C) f32
    q_ref[0] = (y[:, :n_embd] * scale).astype(q_ref.dtype)
    kv_ref[0] = y[:, n_embd:].astype(kv_ref.dtype)


# ----------------------------------------------------------------------------
# Kernel B: flash-style causal MHA (triangular schedule) + fused output proj
# ----------------------------------------------------------------------------
def flash_mha_kernel(qi_ids_ref, ki_ids_ref,          # scalar prefetch (SMEM)
                     q_ref, kv_ref, wp_ref, bp_ref,   # VMEM input tiles
                     o_ref,                           # output tile
                     m_sc, l_sc, acc_sc,              # scratch
                     *, n_head):
    step = pl.program_id(1)
    qi = qi_ids_ref[step]
    ki = ki_ids_ref[step]

    tq = q_ref.shape[1]
    tk = kv_ref.shape[1]
    C = wp_ref.shape[0]
    hs = C // n_head

    q_start = qi * tq
    k_start = ki * tk

    # first kv tile for this q tile -> reset online-softmax state
    @pl.when(ki == 0)
    def _():
        m_sc[...] = jnp.full_like(m_sc, -jnp.inf)
        l_sc[...] = jnp.zeros_like(l_sc)
        acc_sc[...] = jnp.zeros_like(acc_sc)

    def process(apply_mask):
        q = q_ref[0]      # (tq, C) bf16, already scaled by C**-0.5
        kv = kv_ref[0]    # (tk, 2C) bf16
        if apply_mask:
            row = q_start + lax.broadcasted_iota(jnp.int32, (tq, tk), 0)
            col = k_start + lax.broadcasted_iota(jnp.int32, (tq, tk), 1)
            causal = col <= row
        for h in range(n_head):
            q_h = q[:, h * hs:(h + 1) * hs]                       # (tq, hs)
            k_h = kv[:, h * hs:(h + 1) * hs]                      # (tk, hs)
            v_h = kv[:, C + h * hs:C + (h + 1) * hs]              # (tk, hs)

            # Q.K^T without materializing K^T (contract the head dim directly).
            s = lax.dot_general(q_h, k_h, (((1,), (1,)), ((), ())),
                                preferred_element_type=jnp.float32)  # (tq, tk) f32
            if apply_mask:
                s = jnp.where(causal, s, -jnp.inf)

            m_prev = m_sc[h]                                       # (tq, 1)
            l_prev = l_sc[h]
            m_new = jnp.maximum(m_prev, s.max(axis=-1, keepdims=True))
            alpha = jnp.exp(m_prev - m_new)
            p = jnp.exp(s - m_new)                                 # (tq, tk) f32
            l_sc[h] = alpha * l_prev + p.sum(axis=-1, keepdims=True)
            m_sc[h] = m_new

            pv = jnp.dot(p.astype(v_h.dtype), v_h,
                         preferred_element_type=jnp.float32)       # (tq, hs) f32
            acc_sc[:, h * hs:(h + 1) * hs] = (
                alpha * acc_sc[:, h * hs:(h + 1) * hs] + pv)

    # Mask only on tiles that cross the causal diagonal; lower-triangular tiles skip
    # the iotas / compares / selects entirely.  (Upper-triangular tiles are never
    # scheduled at all — see the triangular schedule built in the wrapper.)
    crosses_diag = (k_start + tk - 1) > q_start

    @pl.when(crosses_diag)
    def _():
        process(True)

    @pl.when((k_start + tk - 1) <= q_start)
    def _():
        process(False)

    # last kv tile for this q tile -> normalize in place + ONE (tq,C)@(C,C) projection
    is_last_kv = (k_start + tk) >= (q_start + tq)

    @pl.when(is_last_kv)
    def _():
        for h in range(n_head):
            inv_h = pl.reciprocal(l_sc[h], approx=True)            # (tq, 1), EUP
            acc_sc[:, h * hs:(h + 1) * hs] = acc_sc[:, h * hs:(h + 1) * hs] * inv_h
        attn = acc_sc[...].astype(wp_ref.dtype)                    # (tq, C) bf16
        y = jnp.dot(attn, wp_ref[...], preferred_element_type=jnp.float32)
        o_ref[0] = (y + bp_ref[...].astype(jnp.float32)).astype(o_ref.dtype)


# ----------------------------------------------------------------------------
# Wrapper
# ----------------------------------------------------------------------------
def _pick_tile(T, preferred):
    for t in (preferred, 512, 256, 128, 64, 32, 16, 8):
        if t <= T and T % t == 0:
            return t
    return T


def _triangular_schedule(T, tq, tk):
    # Flattened (qi, ki) pairs covering only kv tiles at or below the causal diagonal.
    qi_ids, ki_ids = [], []
    for qi in range(T // tq):
        last_k = (qi * tq + tq - 1) // tk
        for ki in range(last_k + 1):
            qi_ids.append(qi)
            ki_ids.append(ki)
    return np.asarray(qi_ids, np.int32), np.asarray(ki_ids, np.int32)


def _vmem_limit(nbytes):
    # 2x headroom over the analytic estimate, clamped so it stays comfortable on
    # v7x's 64 MiB physical VMEM (v5e/v6e have 128 MiB and are strictly easier).
    return int(min(56 * 2 ** 20, max(24 * 2 ** 20, 2 * nbytes)))


def multi_head_attention(x, wqkv, wproj, bproj, *, n_head, tq=None, tk=None, tm=None):
    B, T, C = x.shape
    assert wqkv.shape == (C, 3 * C)
    assert wproj.shape == (C, C) and bproj.shape == (1, C)
    assert C % n_head == 0

    tq = _pick_tile(T, 256) if tq is None else tq
    tk = _pick_tile(T, 256) if tk is None else tk
    tm = _pick_tile(T, 256) if tm is None else tm
    assert T % tq == 0 and T % tk == 0 and T % tm == 0

    scale = float(C) ** -0.5   # matches torch: C ** (-0.5) with C = n_embd

    # ---------------- Kernel A: packed QKV projection ----------------
    est_a = (2 * (tm * C * 2)            # x tiles (double-buffered, bf16)
             + 2 * (C * 3 * C * 2)       # weight
             + 2 * (tm * C * 2)          # q out
             + 2 * (tm * 2 * C * 2)      # kv out
             + tm * 3 * C * 4)           # f32 matmul result
    q_act, kv_act = pl.pallas_call(
        functools.partial(qkv_proj_kernel, n_embd=C, scale=scale),
        out_shape=(jax.ShapeDtypeStruct((B, T, C), x.dtype),
                   jax.ShapeDtypeStruct((B, T, 2 * C), x.dtype)),
        grid_spec=pltpu.PrefetchScalarGridSpec(
            num_scalar_prefetch=0,
            grid=(B, T // tm),
            in_specs=[
                pl.BlockSpec((1, tm, C), lambda b, i: (b, i, 0)),
                pl.BlockSpec((C, 3 * C), lambda b, i: (0, 0)),
            ],
            out_specs=[
                pl.BlockSpec((1, tm, C), lambda b, i: (b, i, 0)),
                pl.BlockSpec((1, tm, 2 * C), lambda b, i: (b, i, 0)),
            ],
        ),
        compiler_params=pltpu.CompilerParams(
            dimension_semantics=("parallel", "parallel"),
            vmem_limit_bytes=_vmem_limit(est_a)),
    )(x, wqkv)

    # ---------------- Kernel B: flash attention + fused output projection ----------------
    qi_ids, ki_ids = _triangular_schedule(T, tq, tk)
    n_steps = qi_ids.shape[0]

    est_b = (2 * (tq * C * 2)            # q tiles
             + 2 * (tk * 2 * C * 2)      # kv tiles
             + 2 * (C * C * 2 + C * 2)   # wproj + bias
             + 2 * (tq * C * 2)          # output tiles
             + (2 * n_head * tq * 4)     # m, l scratch
             + tq * C * 4                # acc scratch
             + 4 * tq * tk * 4           # f32 score / prob temporaries
             + tq * C * 4)               # projection temp
    kernel = functools.partial(flash_mha_kernel, n_head=n_head)
    out = pl.pallas_call(
        kernel,
        out_shape=jax.ShapeDtypeStruct((B, T, C), x.dtype),
        grid_spec=pltpu.PrefetchScalarGridSpec(
            num_scalar_prefetch=2,
            grid=(B, n_steps),
            in_specs=[
                pl.BlockSpec((1, tq, C), lambda b, s, qi, ki: (b, qi[s], 0)),
                pl.BlockSpec((1, tk, 2 * C), lambda b, s, qi, ki: (b, ki[s], 0)),
                pl.BlockSpec((C, C), lambda b, s, qi, ki: (0, 0)),
                pl.BlockSpec((1, C), lambda b, s, qi, ki: (0, 0)),
            ],
            out_specs=pl.BlockSpec((1, tq, C), lambda b, s, qi, ki: (b, qi[s], 0)),
            scratch_shapes=[
                pltpu.VMEM((n_head, tq, 1), jnp.float32),   # m
                pltpu.VMEM((n_head, tq, 1), jnp.float32),   # l
                pltpu.VMEM((tq, C), jnp.float32),           # acc (lane-dense, head-major cols)
            ],
        ),
        compiler_params=pltpu.CompilerParams(
            dimension_semantics=("parallel", "arbitrary"),
            vmem_limit_bytes=_vmem_limit(est_b)),
    )(jnp.asarray(qi_ids), jnp.asarray(ki_ids), q_act, kv_act, wproj, bproj)
    return out


# ----------------------------------------------------------------------------
# Pure-JAX reference mirroring the PyTorch forward (per-head, explicit)
# ----------------------------------------------------------------------------
def reference(x, wq_t, wk_t, wv_t, wproj_t, b_proj):
    B, T, C = x.shape
    H = wq_t.shape[0]
    scale = float(C) ** -0.5
    mask = jnp.tril(jnp.ones((T, T), bool))
    outs = []
    for h in range(H):
        q = x @ wq_t[h]
        k = x @ wk_t[h]
        v = x @ wv_t[h]
        wei = (q @ jnp.swapaxes(k, -2, -1)) * scale
        wei = jnp.where(mask, wei, -jnp.inf)
        wei = jax.nn.softmax(wei, axis=-1)
        outs.append(wei @ v)
    cat = jnp.concatenate(outs, axis=-1)        # (B, T, C)
    return cat @ wproj_t + b_proj


if __name__ == "__main__":
    # small config consistent with the module (block_size=16, n_embd=32, n_head=4)
    B, T = 2, 16
    n_embd, n_head = 32, 4
    head_size = n_embd // n_head

    key = jax.random.PRNGKey(0)
    ks = jax.random.split(key, 6)
    x = jax.random.normal(ks[0], (B, T, n_embd), jnp.float32)

    # PyTorch Linear weight is (out, in); we store the transposed per-head matrices.
    wq_t = 0.05 * jax.random.normal(ks[1], (n_head, n_embd, head_size), jnp.float32)
    wk_t = 0.05 * jax.random.normal(ks[2], (n_head, n_embd, head_size), jnp.float32)
    wv_t = 0.05 * jax.random.normal(ks[3], (n_head, n_embd, head_size), jnp.float32)
    w_proj = 0.05 * jax.random.normal(ks[4], (n_embd, n_embd), jnp.float32)   # (out, in)
    b_proj = 0.01 * jax.random.normal(ks[5], (n_embd,), jnp.float32)

    # ---- pack weights into the lane-dense kernel layout (bf16 MXU operands) ----
    head_major = lambda w: jnp.transpose(w, (1, 0, 2)).reshape(n_embd, n_embd)   # (C, H*hs)
    wqkv = jnp.concatenate(
        [head_major(wq_t), head_major(wk_t), head_major(wv_t)], axis=1)          # (C, 3C)
    wproj_t = w_proj.T                                                           # (C, C)
    bproj = b_proj.reshape(1, n_embd)

    bf16 = lambda a: a.astype(jnp.bfloat16)
    out = multi_head_attention(bf16(x), bf16(wqkv), bf16(wproj_t), bf16(bproj),
                               n_head=n_head)
    out = jax.block_until_ready(out)

    # reference computed in f32 from the same bf16-rounded parameter values
    f32 = lambda a: bf16(a).astype(jnp.float32)
    ref = reference(f32(x), f32(wq_t), f32(wk_t), f32(wv_t), f32(w_proj.T), f32(b_proj))

    assert out.shape == (B, T, n_embd)
    out_f32 = np.asarray(out, dtype=np.float32)
    ref_np = np.asarray(ref)
    max_err = float(np.max(np.abs(out_f32 - ref_np)))
    assert np.allclose(out_f32, ref_np, atol=2e-2, rtol=2e-2), f"max err {max_err}"
    print("KERNEL_OK")
</pallas_src>

<mosaic_0001>
module attributes {stable_mosaic.version = 11 : i64} {
  func.func @qkv_proj_kernel(%arg0: i32, %arg1: i32, %arg2: memref<1x16x32xbf16, #tpu.memory_space<vmem>>, %arg3: memref<32x96xbf16, #tpu.memory_space<vmem>>, %arg4: memref<1x16x32xbf16, #tpu.memory_space<vmem>>, %arg5: memref<1x16x64xbf16, #tpu.memory_space<vmem>>) attributes {dimension_semantics = [#tpu.dimension_semantics<parallel>, #tpu.dimension_semantics<parallel>], iteration_bounds = array<i64: 2, 1>, scalar_prefetch = 0 : i64, scratch_operands = 0 : i64, tpu.core_type = #tpu.core_type<tc>, window_params = [{transform_indices = @transform_0, window_bounds = array<i64: 1, 16, 32>}, {pipeline_mode = #tpu.pipeline_mode<synchronous>, transform_indices = @transform_1, window_bounds = array<i64: 32, 96>}, {transform_indices = @transform_2, window_bounds = array<i64: 1, 16, 32>}, {transform_indices = @transform_3, window_bounds = array<i64: 1, 16, 64>}]} {
    %c0 = arith.constant 0 : index
    %c0_0 = arith.constant 0 : index
    %c0_1 = arith.constant 0 : index
    %0 = vector.load %arg2[%c0, %c0_0, %c0_1] : memref<1x16x32xbf16, #tpu.memory_space<vmem>>, vector<1x16x32xbf16>
    %1 = vector.shape_cast %0 : vector<1x16x32xbf16> to vector<16x32xbf16>
    %c0_2 = arith.constant 0 : index
    %c0_3 = arith.constant 0 : index
    %2 = vector.load %arg3[%c0_2, %c0_3] : memref<32x96xbf16, #tpu.memory_space<vmem>>, vector<32x96xbf16>
    %cst = arith.constant dense<0.000000e+00> : vector<16x96xf32>
    %3 = tpu.matmul %1, %2, %cst {dimension_numbers = #tpu.dot_dimension_numbers<[1], [0], [0], [1], [0, 0, 1, 1], [], []>} : vector<16x32xbf16>, vector<32x96xbf16>, vector<16x96xf32> -> vector<16x96xf32>
    %4 = vector.extract_strided_slice %3 {offsets = [0, 0], sizes = [16, 32], strides = [1, 1]} : vector<16x96xf32> to vector<16x32xf32>
    %cst_4 = arith.constant 0.176776692 : f32
    %5 = vector.broadcast %cst_4 : f32 to vector<16x32xf32>
    %6 = arith.mulf %4, %5 : vector<16x32xf32>
    %7 = arith.truncf %6 : vector<16x32xf32> to vector<16x32xbf16>
    %c0_5 = arith.constant 0 : index
    %c0_6 = arith.constant 0 : index
    %c0_7 = arith.constant 0 : index
    %8 = vector.load %arg4[%c0_5, %c0_6, %c0_7] : memref<1x16x32xbf16, #tpu.memory_space<vmem>>, vector<1x16x32xbf16>
    %9 = vector.shape_cast %8 : vector<1x16x32xbf16> to vector<16x32xbf16>
    %10 = vector.shape_cast %7 : vector<16x32xbf16> to vector<1x16x32xbf16>
    tpu.vector_store %arg4[%c0_5, %c0_6, %c0_7], %10 {strides = array<i32>} : memref<1x16x32xbf16, #tpu.memory_space<vmem>>, vector<1x16x32xbf16>,
    %11 = vector.extract_strided_slice %3 {offsets = [0, 32], sizes = [16, 64], strides = [1, 1]} : vector<16x96xf32> to vector<16x64xf32>
    %12 = arith.truncf %11 : vector<16x64xf32> to vector<16x64xbf16>
    %c0_8 = arith.constant 0 : index
    %c0_9 = arith.constant 0 : index
    %c0_10 = arith.constant 0 : index
    %13 = vector.load %arg5[%c0_8, %c0_9, %c0_10] : memref<1x16x64xbf16, #tpu.memory_space<vmem>>, vector<1x16x64xbf16>
    %14 = vector.shape_cast %13 : vector<1x16x64xbf16> to vector<16x64xbf16>
    %15 = vector.shape_cast %12 : vector<16x64xbf16> to vector<1x16x64xbf16>
    tpu.vector_store %arg5[%c0_8, %c0_9, %c0_10], %15 {strides = array<i32>} : memref<1x16x64xbf16, #tpu.memory_space<vmem>>, vector<1x16x64xbf16>,
    return
  }
  func.func @transform_0(%arg0: i32, %arg1: i32) -> (i32, i32, i32) {
    %c0_i32 = arith.constant 0 : i32
    %c0_i32_0 = arith.constant 0 : i32
    return %arg0, %arg1, %c0_i32 : i32, i32, i32
  }
  func.func @transform_1(%arg0: i32, %arg1: i32) -> (i32, i32) {
    %c0_i32 = arith.constant 0 : i32
    %c0_i32_0 = arith.constant 0 : i32
    %c0_i32_1 = arith.constant 0 : i32
    return %c0_i32, %c0_i32_0 : i32, i32
  }
  func.func @transform_2(%arg0: i32, %arg1: i32) -> (i32, i32, i32) {
    %c0_i32 = arith.constant 0 : i32
    %c0_i32_0 = arith.constant 0 : i32
    return %arg0, %arg1, %c0_i32 : i32, i32, i32
  }
  func.func @transform_3(%arg0: i32, %arg1: i32) -> (i32, i32, i32) {
    %c0_i32 = arith.constant 0 : i32
    %c0_i32_0 = arith.constant 0 : i32
    return %arg0, %arg1, %c0_i32 : i32, i32, i32
  }
}

</mosaic_0001>

<llo_original>
// kernel: tpu_custom_call.1
$region0: #{tpu_custom_call.1}
  #allocation0 [shape = 'u32[]', space=smem, size = 0x4, offset = 0x4, fixed_abs, tag = 'smem constant byte address 0x4 - core index']
  #allocation1 [shape = 'u32[144,128]{1,0:T(1,128)}', space=vmem, size = 0x12000, scoped, tag = 'internal scratch']
  %s0 = inlined_call_operand.hbm [shape: bf16[2,16,32], index: 0, kind: input, shape index: {}]
  %s1 = inlined_call_operand.hbm [shape: bf16[32,96], index: 1, kind: input, shape index: {}]
  %s2 = inlined_call_operand.hbm [shape: bf16[2,16,32], index: 2, kind: output, shape index: {0}]
  %s3 = inlined_call_operand.hbm [shape: bf16[2,16,64], index: 3, kind: output, shape index: {1}]
  %4 = xla_tuple %s2, %s3
  %s5 = sld [smem:[#allocation0]]
  $region57: #{tpu_custom_call.1} parent=0
    _
  %s7 = ssub.s32 1, %s5
  %s8 = scalar_select 0, %s7, %s5
  $region1: #{tpu_custom_call.1} parent=0
    #allocation2 [shape = 'u8[8192]{0}', space=vmem, size = 0x2000, scoped, tag = 'input window, operand 0']
    #allocation3 [shape = 's32[2]{0}', space=sflag, size = 0x8, scoped, tag = 'scoped memory for tpu_custom_call.1']
    #allocation4 [shape = 's32[2]{0}', space=sflag, size = 0x8, scoped, tag = 'scoped memory for tpu_custom_call.1']
    #allocation5 [shape = 'u8[8192]{0}', space=vmem, size = 0x2000, scoped, tag = 'input window, operand 1, single buffered']
    #allocation6 [shape = 's32[1]{0}', space=sflag, size = 0x4, scoped, tag = 'scoped memory for tpu_custom_call.1']
    #allocation7 [shape = 'u8[8192]{0}', space=vmem, size = 0x2000, scoped, tag = 'output window, operand 0']
    #allocation8 [shape = 'u8[8192]{0}', space=vmem, size = 0x2000, scoped, tag = 'output window, operand 1']
    #allocation9 [shape = 's32[2]{0}', space=sflag, size = 0x8, scoped, tag = 'scoped memory for tpu_custom_call.1']
    %9 = vsyncpa [#allocation3], 0
    %s10 = scalar_lea.sflag [#allocation3], 1
    %11 = vsyncpa %s10, 0
    %12 = vsyncpa [#allocation6], 0
    %13 = vsyncpa [#allocation4], 0
    %s14 = scalar_lea.sflag [#allocation4], 1
    %15 = vsyncpa %s14, 0
    %16 = vsyncpa [#allocation9], 0
    %s17 = scalar_lea.sflag [#allocation9], 1
    %18 = vsyncpa %s17, 0
    loop: start=0, step=1, limit=4
    $region2: #{tpu_custom_call.1} parent=1 // loop_pre_header
      _
    $region3: #{tpu_custom_call.1} parent=1 // loop_header
      %s20 = sphi 0, %s24
      %p21 = scmp.ge.s32.totalorder %s20, 4
      %s27 = sphi 0, %s39
      %s28 = sphi 0, %s35
      %s29 = sphi 0, %s27
      %s30 = sphi 0, %s28
      %s31 = sphi 0, %s29
      %s32 = sphi 0, %s30
      %s44 = sphi 0, %s46
      %s47 = sphi 0, %s44
      %s48 = sphi 0, %s47
      %s64 = sphi 0, %s48
      %s68 = sphi 0, %s68
      %s70 = sphi 0, %s68
      %s71 = sphi 0, %s70
      %s85 = sphi 0, %s71
      %s93 = sphi 0, %s95
      %s96 = sphi 0, %s93
      %s97 = sphi 0, %s96
      %s113 = sphi 0, %s97
      %s121 = sphi 0, %s123
      %s124 = sphi 0, %s121
      %s125 = sphi 0, %s124
      %s141 = sphi 0, %s125
    $region4: #{tpu_custom_call.1} parent=1 // loop_header_branch
      %23 = sbr.rel (%p21) target = $region8
    $region5: #{tpu_custom_call.1} parent=1 // loop_body
      %s25 = ssub.s32 %s20, 1
      %s26 = ssub.s32 %s20, 2
      %s33 = sadd.s32 1, %s28
      %p34 = scmp.ge.s32.totalorder %s33, 1
      %s35 = scalar_select %p34, 0, %s33
      %s36 = sadd.s32 1, %s27
      %s37 = scalar_select %p34, %s36, %s27
      %p38 = scmp.ge.s32.totalorder %s37, 2
      %s39 = scalar_select %p38, 0, %s37
      %s40 = ssub.s32 %s27, %s39
      %s41 = ssub.s32 %s28, %s35
      %s42 = sor.u32 %s40, %s41
      %p43 = scmp.eq.s32.totalorder %s42, 0
      %s45 = sadd.s32 %s44, 1
      %s46 = scalar_select %p43, %s44, %s45
      %p49 = pneg %p43
      %p50 = scmp.eq.s32.totalorder %s20, 1
      %p51 = por %p49, %p50
      %p52 = scmp.ne.s32.totalorder %s44, %s47
      %p53 = scmp.eq.s32.totalorder %s20, 0
      %p54 = por %p52, %p53
      %p55 = scmp.ne.s32.totalorder %s44, %s47
      %p56 = scmp.eq.s32.totalorder %s25, 1
      %p57 = por %p55, %p56
      %p58 = scmp.ne.s32.totalorder %s47, %s48
      %p59 = scmp.eq.s32.totalorder %s25, 0
      %p60 = por %p58, %p59
      %p61 = scmp.ne.s32.totalorder %s47, %s48
      %p62 = scmp.eq.s32.totalorder %s26, 1
      %p63 = por %p61, %p62
      %p65 = scmp.ne.s32.totalorder %s48, %s64
      %p66 = scmp.eq.s32.totalorder %s26, 0
      %p67 = por %p65, %p66
      %s69 = sadd.s32 %s68, 1
      %p72 = scmp.eq.s32.totalorder %s20, 1
      %p73 = scmp.ne.s32.totalorder %s68, %s70
      %p74 = scmp.eq.s32.totalorder %s20, 0
      %p75 = por %p73, %p74
      %p76 = scmp.ne.s32.totalorder %s68, %s70
      %p77 = scmp.eq.s32.totalorder %s25, 1
      %p78 = por %p76, %p77
      %p79 = scmp.ne.s32.totalorder %s70, %s71
      %p80 = scmp.eq.s32.totalorder %s25, 0
      %p81 = por %p79, %p80
      %p82 = scmp.ne.s32.totalorder %s70, %s71
      %p83 = scmp.eq.s32.totalorder %s26, 1
      %p84 = por %p82, %p83
      %p86 = scmp.ne.s32.totalorder %s71, %s85
      %p87 = scmp.eq.s32.totalorder %s26, 0
      %p88 = por %p86, %p87
      %s89 = ssub.s32 %s27, %s39
      %s90 = ssub.s32 %s28, %s35
      %s91 = sor.u32 %s89, %s90
      %p92 = scmp.eq.s32.totalorder %s91, 0
      %s94 = sadd.s32 %s93, 1
      %s95 = scalar_select %p92, %s93, %s94
      %p98 = pneg %p92
      %p99 = scmp.eq.s32.totalorder %s20, 1
      %p100 = por %p98, %p99
      %p101 = scmp.ne.s32.totalorder %s93, %s96
      %p102 = scmp.eq.s32.totalorder %s20, 0
      %p103 = por %p101, %p102
      %p104 = scmp.ne.s32.totalorder %s93, %s96
      %p105 = scmp.eq.s32.totalorder %s25, 1
      %p106 = por %p104, %p105
      %p107 = scmp.ne.s32.totalorder %s96, %s97
      %p108 = scmp.eq.s32.totalorder %s25, 0
      %p109 = por %p107, %p108
      %p110 = scmp.ne.s32.totalorder %s96, %s97
      %p111 = scmp.eq.s32.totalorder %s26, 1
      %p112 = por %p110, %p111
      %p114 = scmp.ne.s32.totalorder %s97, %s113
      %p115 = scmp.eq.s32.totalorder %s26, 0
      %p116 = por %p114, %p115
      %s117 = ssub.s32 %s27, %s39
      %s118 = ssub.s32 %s28, %s35
      %s119 = sor.u32 %s117, %s118
      %p120 = scmp.eq.s32.totalorder %s119, 0
      %s122 = sadd.s32 %s121, 1
      %s123 = scalar_select %p120, %s121, %s122
      %p126 = pneg %p120
      %p127 = scmp.eq.s32.totalorder %s20, 1
      %p128 = por %p126, %p127
      %p129 = scmp.ne.s32.totalorder %s121, %s124
      %p130 = scmp.eq.s32.totalorder %s20, 0
      %p131 = por %p129, %p130
      %p132 = scmp.ne.s32.totalorder %s121, %s124
      %p133 = scmp.eq.s32.totalorder %s25, 1
      %p134 = por %p132, %p133
      %p135 = scmp.ne.s32.totalorder %s124, %s125
      %p136 = scmp.eq.s32.totalorder %s25, 0
      %p137 = por %p135, %p136
      %p138 = scmp.ne.s32.totalorder %s124, %s125
      %p139 = scmp.eq.s32.totalorder %s26, 1
      %p140 = por %p138, %p139
      %p142 = scmp.ne.s32.totalorder %s125, %s141
      %p143 = scmp.eq.s32.totalorder %s26, 0
      %p144 = por %p142, %p143
      %p145 = scmp.le.s32.totalorder 1, %s20
      %p146 = scmp.lt.s32.totalorder %s20, 3
      %p147 = pnand %p145, %p146
      %p148 = pneg %p147
      // Predicated region
      $region9: #{tpu_custom_call.1} parent=5 // pred_check
        _
      $region10: #{tpu_custom_call.1} parent=5 // pred_check_branch
        %150 = sbr.rel (%p147) target = $region12
      $region11: #{tpu_custom_call.1} parent=5 // pred_region
        %s151 = ssub.s32 %s20, 1
        // Predicated region
        $region13: #{tpu_custom_call.1} parent=11 // pred_check
          %p152 = pneg %p81
        $region14: #{tpu_custom_call.1} parent=11 // pred_check_branch
          %154 = sbr.rel (%p152) target = $region16
        $region15: #{tpu_custom_call.1} parent=11 // pred_region
          %s156 = ssub.s32 256, 256
          %157 = vsyncadd [#allocation6], %s156
          %s158 = sshll.u32 [#allocation5], 4
          %s159 = int_to_ptr.vmem [resolvable:$true] %s158
          %164 = dma.hbm_to_vmem [thread:$0]  %s1, 256, %s159, [#allocation6], 64, 64, 4
        $region16: #{tpu_custom_call.1} parent=11 // pred_fallthru
          _
      $region12: #{tpu_custom_call.1} parent=5 // pred_fallthru
        _
      %p165 = scmp.lt.s32.totalorder %s20, 2
      // Predicated region
      $region17: #{tpu_custom_call.1} parent=5 // pred_check
        %p166 = pneg %p165
      $region18: #{tpu_custom_call.1} parent=5 // pred_check_branch
        %168 = sbr.rel (%p166) target = $region20
      $region19: #{tpu_custom_call.1} parent=5 // pred_region
        // Predicated region
        $region21: #{tpu_custom_call.1} parent=19 // pred_check
          %p169 = pneg %p54
        $region22: #{tpu_custom_call.1} parent=19 // pred_check_branch
          %171 = sbr.rel (%p169) target = $region24
        $region23: #{tpu_custom_call.1} parent=19 // pred_region
          %s172 = sand.u32 %s44, 1
          %s173 = scalar_lea.sflag [#allocation3], %s172
          %s174 = sand.u32 %s44, 1
          %s175 = smul.addr %s174, 8
          %s176 = scalar_lea.vmem [#allocation2], %s175
          %s177 = smul.u32 2, %s28
          %s179 = ssub.s32 128, 128
          %180 = vsyncadd %s173, %s179
          %s181 = smul.addr %s27, 2
          %s182 = sadd.s32 %s177, %s181
          %s183 = smul.addr %s182, 64
          %s184 = scalar_lea.hbm %s0, %s183
          %s185 = sshll.u32 %s176, 4
          %s186 = int_to_ptr.vmem [resolvable:$true] %s185
          %191 = dma.hbm_to_vmem [thread:$0]  %s184, 128, %s186, %s173, 64, 64, 4
        $region24: #{tpu_custom_call.1} parent=19 // pred_fallthru
          _
      $region20: #{tpu_custom_call.1} parent=5 // pred_fallthru
        _
      %p192 = scmp.le.s32.totalorder 1, %s20
      %p193 = scmp.lt.s32.totalorder %s20, 3
      %p194 = pnand %p192, %p193
      %p195 = pneg %p194
      // Predicated region
      $region25: #{tpu_custom_call.1} parent=5 // pred_check
        _
      $region26: #{tpu_custom_call.1} parent=5 // pred_check_branch
        %197 = sbr.rel (%p194) target = $region28
      $region27: #{tpu_custom_call.1} parent=5 // pred_region
        %s198 = ssub.s32 %s20, 1
        %s199 = sand.u32 %s47, 1
        %s200 = scalar_lea.sflag [#allocation3], %s199
        %s201 = sand.u32 %s47, 1
        %s202 = smul.addr %s201, 8
        %s203 = scalar_lea.vmem [#allocation2], %s202
        // Predicated region
        $region29: #{tpu_custom_call.1} parent=27 // pred_check
          %p204 = pneg %p60
        $region30: #{tpu_custom_call.1} parent=27 // pred_check_branch
          %206 = sbr.rel (%p204) target = $region32
        $region31: #{tpu_custom_call.1} parent=27 // pred_region
          %207 = dma.done %s200, 128
        $region32: #{tpu_custom_call.1} parent=27 // pred_fallthru
          _
        // Predicated region
        $region33: #{tpu_custom_call.1} parent=27 // pred_check
          %p208 = pneg %p81
        $region34: #{tpu_custom_call.1} parent=27 // pred_check_branch
          %210 = sbr.rel (%p208) target = $region36
        $region35: #{tpu_custom_call.1} parent=27 // pred_region
          %211 = dma.done [#allocation6], 256
        $region36: #{tpu_custom_call.1} parent=27 // pred_fallthru
          _
        %s212 = sand.u32 %s47, 1
        %s213 = scalar_lea.sflag [#allocation3], %s212
        %s214 = sand.u32 %s47, 1
        %s215 = smul.addr %s214, 8
        %s216 = scalar_lea.vmem [#allocation2], %s215
        %p217 = pneg %p60
        %p218 = pneg %p57
        %p219 = pneg %p81
        %p220 = pneg %p78
        %p221 = pneg %p109
        %p222 = pneg %p106
        %s223 = sand.u32 %s96, 1
        %s224 = scalar_lea.sflag [#allocation4], %s223
        %s225 = sand.u32 %s96, 1
        %s226 = smul.addr %s225, 8
        %s227 = scalar_lea.vmem [#allocation7], %s226
        %p228 = pneg %p137
        %p229 = pneg %p134
        %s230 = sand.u32 %s124, 1
        %s231 = scalar_lea.sflag [#allocation9], %s230
        %s232 = sand.u32 %s124, 1
        %s233 = smul.addr %s232, 8
        %s234 = scalar_lea.vmem [#allocation8], %s233
        %s235 = smul.u32 2, %s30
        %s236 = smul.u32 2, %s30
        %s237 = smul.u32 2, %s30
        %v239 = vld [vmem:[%s203] sm:$0xf]
        %v240 = vld [vmem:[%s203 + $0x4] sm:$0xf]
        %v241 = vld [vmem:[#allocation5] sm:$0xf]
        %v242 = vld [vmem:[#allocation5 + $0x4] sm:$0xf]
        %v243 = vld [vmem:[#allocation5 + $0x8] sm:$0xf]
        %v244 = vld [vmem:[#allocation5 + $0xc] sm:$0xf]
        %v247 = vunpack.c.l.b16 %v239
        %v248 = vunpack.c.l.b16 %v240
        %v249 = vpack.c.b16 %v248, %v247
        %v254 = vunpack.c.l.b16 %v241
        %v255 = vunpack.c.l.b16 %v242
        %v256 = vunpack.c.l.b16 %v243
        %v257 = vunpack.c.l.b16 %v244
        %v258 = vpack.c.b16 %v255, %v254
        %v259 = vpack.c.b16 %v257, %v256
        %vm262 = vcmask 261120
        %v264 = vsel %vm262, %v249, 0
        %266 = vmatprep.subr.bf16.mxu0 0
        %267 = vmatpush1.bf16.msra.mxu0 %v258
        %268 = vmatprep.subr.bf16.mxu0 0
        %269 = vmatpush1.bf16.msra.mxu0 %v259
        %270 = vmatprep.subr.bf16.mxu0 0
        %271 = vmatpush1.bf16.msra.mxu0 0
        %272 = vmatprep.subr.bf16.mxu0 0
        %273 = vmatpush1.bf16.msra.mxu0 0
        %274 = vmatprep.subr.bf16.mxu0 0
        %275 = vmatpush1.bf16.msra.mxu0 0
        %276 = vmatprep.subr.bf16.mxu0 0
        %277 = vmatpush1.bf16.msra.mxu0 0
        %278 = vmatprep.subr.bf16.mxu0 0
        %279 = vmatpush1.bf16.msra.mxu0 0
        %280 = vmatprep.subr.bf16.mxu0 0
        %281 = vmatpush1.bf16.msra.mxu0 0
        %282 = vmatprep.subr.bf16.mxu0 0
        %283 = vmatpush1.bf16.msra.mxu0 0
        %284 = vmatprep.subr.bf16.mxu0 0
        %285 = vmatpush1.bf16.msra.mxu0 0
        %286 = vmatprep.subr.bf16.mxu0 0
        %287 = vmatpush1.bf16.msra.mxu0 0
        %288 = vmatprep.subr.bf16.mxu0 0
        %289 = vmatpush1.bf16.msra.mxu0 0
        %290 = vmatprep.subr.bf16.mxu0 0
        %291 = vmatpush1.bf16.msra.mxu0 0
        %292 = vmatprep.subr.bf16.mxu0 0
        %293 = vmatpush1.bf16.msra.mxu0 0
        %294 = vmatprep.subr.bf16.mxu0 0
        %295 = vmatpush1.bf16.msra.mxu0 0
        %296 = vmatprep.subr.bf16.mxu0 0
        %297 = vmatpush1.bf16.msra.mxu0 0
        %298 = vmatprep.mubr.bf16.mxu0 0
        %299 = vmatmul.mubr.bf16.gmra.mrb[0].mxu0 %v264
        %v300 = vpop.f32.mrb[0].mxu0
        %v301 = vadd.f32 0.0, %v300
        %v302 = vpop.f32.mrb[0].mxu0
        %v303 = vpop.f32.mrb[0].mxu0
        %v304 = vadd.f32 0.0, %v303
        %v305 = vpop.f32.mrb[0].mxu0
        %306 = vdwg.mxu0
        %v307 = vmul.f32 %v301, 0.17677669
        %v308 = vmul.f32 %v304, 0.17677669
        %v309 = vpack.c.bf16 %v308, %v307
        %v311 = vunpack.c.l.b16 %v309
        %v312 = vunpack.c.h.b16 %v309
        %v313 = vpack.c.b16 %v311, %v311
        %v314 = vpack.c.b16 %v312, %v312
        %vm317 = vcmask 257024
        %318 = vst.msk [vmem:[%s227] sm:$0xf] %vm317, %v313
        %319 = vst.msk [vmem:[%s227 + $0x4] sm:$0xf] %vm317, %v314
        %v320 = vpack.c.bf16 %v304, %v301
        %v322 = vunpack.c.l.b16 %v320
        %v323 = vunpack.c.h.b16 %v320
        %v324 = vpack.c.b16 %v322, %v322
        %v325 = vpack.c.b16 %v323, %v323
        %326 = vrot.lane.b32.xlu0 %v324, 96
        %v327 = vpop.permute.xlu0 %326
        %328 = vrot.lane.b32.xlu0 %v325, 96
        %v329 = vpop.permute.xlu0 %328
        %vm332 = vcmask 519168
        %333 = vst.msk [vmem:[%s234] sm:$0xf] %vm332, %v327
        %334 = vst.msk [vmem:[%s234 + $0x4] sm:$0xf] %vm332, %v329
        %s335 = sand.u32 %s96, 1
        %s336 = scalar_lea.sflag [#allocation4], %s335
        %s337 = sand.u32 %s96, 1
        %s338 = smul.addr %s337, 8
        %s339 = scalar_lea.vmem [#allocation7], %s338
        %s340 = sand.u32 %s124, 1
        %s341 = scalar_lea.sflag [#allocation9], %s340
        %s342 = sand.u32 %s124, 1
        %s343 = smul.addr %s342, 8
        %s344 = scalar_lea.vmem [#allocation8], %s343
        // Predicated region
        $region37: #{tpu_custom_call.1} parent=27 // pred_check
          %p345 = pneg %p106
        $region38: #{tpu_custom_call.1} parent=27 // pred_check_branch
          %347 = sbr.rel (%p345) target = $region40
        $region39: #{tpu_custom_call.1} parent=27 // pred_region
          %s348 = smul.u32 2, %s30
          %s350 = ssub.s32 128, 128
          %351 = vsyncadd %s336, %s350
          %s352 = smul.addr %s29, 2
          %s353 = sadd.s32 %s348, %s352
          %s354 = smul.addr %s353, 64
          %s355 = scalar_lea.hbm %s2, %s354
          %s356 = sshll.u32 %s339, 4
          %s357 = int_to_ptr.vmem [resolvable:$true] %s356
          %362 = dma.vmem_to_hbm [thread:$0]  %s357, 128, %s355, %s336, 64, 64, 4
        $region40: #{tpu_custom_call.1} parent=27 // pred_fallthru
          _
        // Predicated region
        $region41: #{tpu_custom_call.1} parent=27 // pred_check
          %p363 = pneg %p134
        $region42: #{tpu_custom_call.1} parent=27 // pred_check_branch
          %365 = sbr.rel (%p363) target = $region44
        $region43: #{tpu_custom_call.1} parent=27 // pred_region
          %s366 = smul.u32 2, %s30
          %s368 = ssub.s32 128, 128
          %369 = vsyncadd %s341, %s368
          %s370 = smul.addr %s29, 2
          %s371 = sadd.s32 %s366, %s370
          %s372 = smul.addr %s371, 64
          %s373 = scalar_lea.hbm %s3, %s372
          %s374 = sshll.u32 %s344, 4
          %s375 = int_to_ptr.vmem [resolvable:$true] %s374
          %380 = dma.vmem_to_hbm [thread:$0]  %s375, 128, %s373, %s341, 64, 64, 4
        $region44: #{tpu_custom_call.1} parent=27 // pred_fallthru
          _
      $region28: #{tpu_custom_call.1} parent=5 // pred_fallthru
        _
      %p381 = scmp.le.s32.totalorder 2, %s20
      // Predicated region
      $region45: #{tpu_custom_call.1} parent=5 // pred_check
        %p382 = pneg %p381
      $region46: #{tpu_custom_call.1} parent=5 // pred_check_branch
        %384 = sbr.rel (%p382) target = $region48
      $region47: #{tpu_custom_call.1} parent=5 // pred_region
        %s385 = ssub.s32 %s20, 2
        // Predicated region
        $region49: #{tpu_custom_call.1} parent=47 // pred_check
          %p386 = pneg %p112
        $region50: #{tpu_custom_call.1} parent=47 // pred_check_branch
          %388 = sbr.rel (%p386) target = $region52
        $region51: #{tpu_custom_call.1} parent=47 // pred_region
          %s389 = sand.u32 %s97, 1
          %s390 = scalar_lea.sflag [#allocation4], %s389
          %s391 = sand.u32 %s97, 1
          %s392 = smul.addr %s391, 8
          %s393 = scalar_lea.vmem [#allocation7], %s392
          %394 = dma.done %s390, 128
        $region52: #{tpu_custom_call.1} parent=47 // pred_fallthru
          _
        // Predicated region
        $region53: #{tpu_custom_call.1} parent=47 // pred_check
          %p395 = pneg %p140
        $region54: #{tpu_custom_call.1} parent=47 // pred_check_branch
          %397 = sbr.rel (%p395) target = $region56
        $region55: #{tpu_custom_call.1} parent=47 // pred_region
          %s398 = sand.u32 %s125, 1
          %s399 = scalar_lea.sflag [#allocation9], %s398
          %s400 = sand.u32 %s125, 1
          %s401 = smul.addr %s400, 8
          %s402 = scalar_lea.vmem [#allocation8], %s401
          %403 = dma.done %s399, 128
        $region56: #{tpu_custom_call.1} parent=47 // pred_fallthru
          _
      $region48: #{tpu_custom_call.1} parent=5 // pred_fallthru
        _
    $region6: #{tpu_custom_call.1} parent=1 // loop_footer
      %s24 = sadd.s32 1, %s20
    $region7: #{tpu_custom_call.1} parent=1 // loop_footer_branch
      %19 = sbr.rel target = $region3
    $region8: #{tpu_custom_call.1} parent=1 // loop_exit
      _
    %404 = vsyncpa [#allocation3], 1
    %s405 = scalar_lea.sflag [#allocation3], 1
    %406 = vsyncpa %s405, 1
    %407 = vsyncpa [#allocation6], 1
    %408 = vsyncpa [#allocation4], 1
    %s409 = scalar_lea.sflag [#allocation4], 1
    %410 = vsyncpa %s409, 1
    %411 = vsyncpa [#allocation9], 1
    %s412 = scalar_lea.sflag [#allocation9], 1
    %413 = vsyncpa %s412, 1

</llo_original>
